<compile_context>
chip_gen: v7x
topology: tpu7x:2x2x1
jax: 0.10.0
libtpu: 0.0.40
codegen_flags: <defaults>
</compile_context>

<pallas_src>
import jax
import jax.numpy as jnp
from jax.experimental import pallas as pl
from jax.experimental.pallas import tpu as pltpu


def _edge_inputs_kernel(img_ref, edg_ref, msk_ref, out_ref):
    # img_ref/edg_ref/msk_ref: (BN, TH, W) VMEM tiles (channel dim squeezed)
    # out_ref:                 (BN, 3, TH, W) VMEM tile
    m = msk_ref[...]                         # (BN, TH, W)
    img = img_ref[...]
    edg = edg_ref[...]
    one_minus_m = 1.0 - m

    images_masked = img * one_minus_m + m
    edges_masked = edg * one_minus_m

    out_ref[:, 0:1] = images_masked[:, None, :, :].astype(out_ref.dtype)
    out_ref[:, 1:2] = edges_masked[:, None, :, :].astype(out_ref.dtype)
    out_ref[:, 2:3] = m[:, None, :, :].astype(out_ref.dtype)


def _choose_tiles(N, H, W, itemsize, vmem_budget_bytes):
    """Pick (BN, TH) so the double-buffered working set fits the VMEM budget.

    Per grid step the pipeline holds 2 buffers x (3 inputs of BN*TH*W + 1 output of
    BN*3*TH*W) = 12 * BN * TH * W elements.
    """
    bytes_per_row = 12 * W * itemsize                    # per row of width W
    max_rows = max(8, vmem_budget_bytes // bytes_per_row)

    # H tile: largest multiple of 8 that divides H (or the full H), capped by budget.
    # (Last-two block dims must be multiples of (8, 128) or equal the full dims.)
    if H <= max_rows or H % 8 != 0:
        TH = H
    else:
        TH = min(H, (max_rows // 8) * 8)
        while TH > 8 and H % TH != 0:
            TH -= 8
        if H % TH != 0:
            TH = H

    # Batch grouping: pack several whole (TH, W) slabs per step if budget allows.
    BN = max(1, min(N, max_rows // max(TH, 1)))
    while N % BN != 0:
        BN -= 1
    return BN, TH


def edge_model_forward(images, edges, masks, *, out_dtype=None,
                       vmem_budget_bytes=12 * 1024 * 1024):
    """Fused masking + channel concat (EdgeModel.forward pre-generator stage)."""
    N, C, H, W = images.shape
    assert C == 1 and edges.shape == images.shape and masks.shape == images.shape
    out_dtype = images.dtype if out_dtype is None else jnp.dtype(out_dtype)

    BN, TH = _choose_tiles(N, H, W, jnp.dtype(images.dtype).itemsize, vmem_budget_bytes)

    # None => size-1 channel dim is squeezed out of the kernel refs.
    in_spec = pl.BlockSpec((BN, None, TH, W), lambda n, h: (n, 0, h, 0))
    out_spec = pl.BlockSpec((BN, 3, TH, W), lambda n, h: (n, 0, h, 0))

    return pl.pallas_call(
        _edge_inputs_kernel,
        out_shape=jax.ShapeDtypeStruct((N, 3, H, W), out_dtype),
        grid=(N // BN, H // TH),
        in_specs=[in_spec, in_spec, in_spec],
        out_specs=out_spec,
        compiler_params=pltpu.CompilerParams(
            dimension_semantics=("parallel", "parallel"),
        ),
    )(images, edges, masks)


def _reference(images, edges, masks):
    edges_masked = edges * (1.0 - masks)
    images_masked = images * (1.0 - masks) + masks
    return jnp.concatenate((images_masked, edges_masked, masks), axis=1)


if __name__ == "__main__":
    key = jax.random.PRNGKey(0)
    k_img, k_edg, k_msk = jax.random.split(key, 3)

    N, C, H, W = 2, 1, 16, 128  # small, lane-aligned (W=128, H multiple of 8)
    images = jax.random.uniform(k_img, (N, C, H, W), dtype=jnp.float32)
    edges = jax.random.uniform(k_edg, (N, C, H, W), dtype=jnp.float32)
    masks = (jax.random.uniform(k_msk, (N, C, H, W)) > 0.5).astype(jnp.float32)

    ref = _reference(images, edges, masks)

    # Default (f32) path — bit-exact vs reference.
    out = jax.block_until_ready(edge_model_forward(images, edges, masks))
    assert out.shape == (N, 3, H, W)
    assert out.dtype == images.dtype
    assert jnp.allclose(out, ref, atol=1e-6), "mismatch vs reference (f32)"

    # bf16 output path (for a bf16 generator): halves HBM write traffic.
    out_bf16 = jax.block_until_ready(
        edge_model_forward(images, edges, masks, out_dtype=jnp.bfloat16))
    assert out_bf16.dtype == jnp.bfloat16
    assert jnp.allclose(out_bf16.astype(jnp.float32), ref, atol=1e-2), \
        "mismatch vs reference (bf16)"

    print("KERNEL_OK")
</pallas_src>

<mosaic_0001>
module attributes {stable_mosaic.version = 11 : i64} {
  func.func @_edge_inputs_kernel(%arg0: i32, %arg1: i32, %arg2: memref<2x1x16x128xf32, #tpu.memory_space<vmem>>, %arg3: memref<2x1x16x128xf32, #tpu.memory_space<vmem>>, %arg4: memref<2x1x16x128xf32, #tpu.memory_space<vmem>>, %arg5: memref<2x3x16x128xf32, #tpu.memory_space<vmem>>) attributes {dimension_semantics = [#tpu.dimension_semantics<parallel>, #tpu.dimension_semantics<parallel>], iteration_bounds = array<i64: 1, 1>, scalar_prefetch = 0 : i64, scratch_operands = 0 : i64, tpu.core_type = #tpu.core_type<tc>, window_params = [{transform_indices = @transform_0, window_bounds = array<i64: 2, 1, 16, 128>}, {transform_indices = @transform_1, window_bounds = array<i64: 2, 1, 16, 128>}, {transform_indices = @transform_2, window_bounds = array<i64: 2, 1, 16, 128>}, {transform_indices = @transform_3, window_bounds = array<i64: 2, 3, 16, 128>}]} {
    %c0 = arith.constant 0 : index
    %c0_0 = arith.constant 0 : index
    %c0_1 = arith.constant 0 : index
    %c0_2 = arith.constant 0 : index
    %0 = vector.load %arg4[%c0, %c0_0, %c0_1, %c0_2] : memref<2x1x16x128xf32, #tpu.memory_space<vmem>>, vector<2x1x16x128xf32>
    %1 = vector.shape_cast %0 : vector<2x1x16x128xf32> to vector<2x16x128xf32>
    %c0_3 = arith.constant 0 : index
    %c0_4 = arith.constant 0 : index
    %c0_5 = arith.constant 0 : index
    %c0_6 = arith.constant 0 : index
    %2 = vector.load %arg2[%c0_3, %c0_4, %c0_5, %c0_6] : memref<2x1x16x128xf32, #tpu.memory_space<vmem>>, vector<2x1x16x128xf32>
    %3 = vector.shape_cast %2 : vector<2x1x16x128xf32> to vector<2x16x128xf32>
    %c0_7 = arith.constant 0 : index
    %c0_8 = arith.constant 0 : index
    %c0_9 = arith.constant 0 : index
    %c0_10 = arith.constant 0 : index
    %4 = vector.load %arg3[%c0_7, %c0_8, %c0_9, %c0_10] : memref<2x1x16x128xf32, #tpu.memory_space<vmem>>, vector<2x1x16x128xf32>
    %5 = vector.shape_cast %4 : vector<2x1x16x128xf32> to vector<2x16x128xf32>
    %cst = arith.constant 1.000000e+00 : f32
    %6 = vector.broadcast %cst : f32 to vector<2x16x128xf32>
    %7 = arith.subf %6, %1 : vector<2x16x128xf32>
    %8 = arith.mulf %3, %7 : vector<2x16x128xf32>
    %9 = arith.addf %8, %1 : vector<2x16x128xf32>
    %10 = arith.mulf %5, %7 : vector<2x16x128xf32>
    %11 = vector.shape_cast %9 : vector<2x16x128xf32> to vector<2x1x16x128xf32>
    %c0_11 = arith.constant 0 : index
    %c0_12 = arith.constant 0 : index
    %c0_13 = arith.constant 0 : index
    %c0_14 = arith.constant 0 : index
    %12 = vector.load %arg5[%c0_11, %c0_12, %c0_13, %c0_14] : memref<2x3x16x128xf32, #tpu.memory_space<vmem>>, vector<2x1x16x128xf32>
    tpu.vector_store %arg5[%c0_11, %c0_12, %c0_13, %c0_14], %11 {strides = array<i32>} : memref<2x3x16x128xf32, #tpu.memory_space<vmem>>, vector<2x1x16x128xf32>,
    %13 = vector.shape_cast %10 : vector<2x16x128xf32> to vector<2x1x16x128xf32>
    %c0_15 = arith.constant 0 : index
    %c1 = arith.constant 1 : index
    %c0_16 = arith.constant 0 : index
    %c0_17 = arith.constant 0 : index
    %14 = vector.load %arg5[%c0_15, %c1, %c0_16, %c0_17] : memref<2x3x16x128xf32, #tpu.memory_space<vmem>>, vector<2x1x16x128xf32>
    tpu.vector_store %arg5[%c0_15, %c1, %c0_16, %c0_17], %13 {strides = array<i32>} : memref<2x3x16x128xf32, #tpu.memory_space<vmem>>, vector<2x1x16x128xf32>,
    %15 = vector.shape_cast %1 : vector<2x16x128xf32> to vector<2x1x16x128xf32>
    %c0_18 = arith.constant 0 : index
    %c2 = arith.constant 2 : index
    %c0_19 = arith.constant 0 : index
    %c0_20 = arith.constant 0 : index
    %16 = vector.load %arg5[%c0_18, %c2, %c0_19, %c0_20] : memref<2x3x16x128xf32, #tpu.memory_space<vmem>>, vector<2x1x16x128xf32>
    tpu.vector_store %arg5[%c0_18, %c2, %c0_19, %c0_20], %15 {strides = array<i32>} : memref<2x3x16x128xf32, #tpu.memory_space<vmem>>, vector<2x1x16x128xf32>,
    return
  }
  func.func @transform_0(%arg0: i32, %arg1: i32) -> (i32, i32, i32, i32) {
    %c0_i32 = arith.constant 0 : i32
    %c0_i32_0 = arith.constant 0 : i32
    %c0_i32_1 = arith.constant 0 : i32
    return %arg0, %c0_i32, %arg1, %c0_i32_0 : i32, i32, i32, i32
  }
  func.func @transform_1(%arg0: i32, %arg1: i32) -> (i32, i32, i32, i32) {
    %c0_i32 = arith.constant 0 : i32
    %c0_i32_0 = arith.constant 0 : i32
    %c0_i32_1 = arith.constant 0 : i32
    return %arg0, %c0_i32, %arg1, %c0_i32_0 : i32, i32, i32, i32
  }
  func.func @transform_2(%arg0: i32, %arg1: i32) -> (i32, i32, i32, i32) {
    %c0_i32 = arith.constant 0 : i32
    %c0_i32_0 = arith.constant 0 : i32
    %c0_i32_1 = arith.constant 0 : i32
    return %arg0, %c0_i32, %arg1, %c0_i32_0 : i32, i32, i32, i32
  }
  func.func @transform_3(%arg0: i32, %arg1: i32) -> (i32, i32, i32, i32) {
    %c0_i32 = arith.constant 0 : i32
    %c0_i32_0 = arith.constant 0 : i32
    %c0_i32_1 = arith.constant 0 : i32
    return %arg0, %c0_i32, %arg1, %c0_i32_0 : i32, i32, i32, i32
  }
}

</mosaic_0001>

<llo_original>
// kernel: tpu_custom_call.1
$region0: #{tpu_custom_call.1}
  #allocation0 [shape = 'u32[]', space=smem, size = 0x4, offset = 0x4, fixed_abs, tag = 'smem constant byte address 0x4 - core index']
  #allocation1 [shape = 'u32[144,128]{1,0:T(1,128)}', space=vmem, size = 0x12000, scoped, tag = 'internal scratch']
  %s0 = inlined_call_operand.hbm [shape: f32[2,1,16,128], index: 0, kind: input, shape index: {}]
  %s1 = inlined_call_operand.hbm [shape: f32[2,1,16,128], index: 1, kind: input, shape index: {}]
  %s2 = inlined_call_operand.hbm [shape: f32[2,1,16,128], index: 2, kind: input, shape index: {}]
  %s3 = inlined_call_operand.hbm [shape: f32[2,3,16,128], index: 3, kind: output, shape index: {}]
  %s4 = sld [smem:[#allocation0]]
  $region34: #{tpu_custom_call.1} parent=0
    _
  %s6 = ssub.s32 1, %s4
  %s7 = scalar_select 0, %s6, %s4
  $region1: #{tpu_custom_call.1} parent=0
    #allocation2 [shape = 'u8[16384]{0}', space=vmem, size = 0x4000, scoped, tag = 'input window, operand 0, single buffered']
    #allocation3 [shape = 's32[1]{0}', space=sflag, size = 0x4, scoped, tag = 'scoped memory for tpu_custom_call.1']
    #allocation4 [shape = 's32[1]{0}', space=sflag, size = 0x4, scoped, tag = 'scoped memory for tpu_custom_call.1']
    #allocation5 [shape = 'u8[16384]{0}', space=vmem, size = 0x4000, scoped, tag = 'input window, operand 1, single buffered']
    #allocation6 [shape = 's32[1]{0}', space=sflag, size = 0x4, scoped, tag = 'scoped memory for tpu_custom_call.1']
    #allocation7 [shape = 'u8[16384]{0}', space=vmem, size = 0x4000, scoped, tag = 'input window, operand 2, single buffered']
    #allocation8 [shape = 'u8[49152]{0}', space=vmem, size = 0xc000, scoped, tag = 'output window, operand 0, single buffered']
    %8 = vsyncpa [#allocation3], 0
    %9 = vsyncpa [#allocation6], 0
    %10 = vsyncpa [#allocation4], 0
    // Predicated region
    $region2: #{tpu_custom_call.1} parent=1 // pred_check
      _
    $region3: #{tpu_custom_call.1} parent=1 // pred_check_branch
      %12 = sbr.rel (0) target = $region5
    $region4: #{tpu_custom_call.1} parent=1 // pred_region
      %s14 = ssub.s32 512, 512
      %15 = vsyncadd [#allocation3], %s14
      %s16 = sshll.u32 [#allocation2], 4
      %s17 = int_to_ptr.vmem [resolvable:$true] %s16
      %22 = dma.hbm_to_vmem [thread:$0]  %s0, 512, %s17, [#allocation3], 128, 128, 8
    $region5: #{tpu_custom_call.1} parent=1 // pred_fallthru
      _
    // Predicated region
    $region6: #{tpu_custom_call.1} parent=1 // pred_check
      _
    $region7: #{tpu_custom_call.1} parent=1 // pred_check_branch
      %24 = sbr.rel (0) target = $region9
    $region8: #{tpu_custom_call.1} parent=1 // pred_region
      %s26 = ssub.s32 512, 512
      %27 = vsyncadd [#allocation6], %s26
      %s28 = sshll.u32 [#allocation5], 4
      %s29 = int_to_ptr.vmem [resolvable:$true] %s28
      %34 = dma.hbm_to_vmem [thread:$0]  %s1, 512, %s29, [#allocation6], 128, 128, 8
    $region9: #{tpu_custom_call.1} parent=1 // pred_fallthru
      _
    // Predicated region
    $region10: #{tpu_custom_call.1} parent=1 // pred_check
      _
    $region11: #{tpu_custom_call.1} parent=1 // pred_check_branch
      %36 = sbr.rel (0) target = $region13
    $region12: #{tpu_custom_call.1} parent=1 // pred_region
      %s38 = ssub.s32 512, 512
      %39 = vsyncadd [#allocation6], %s38
      %s40 = sshll.u32 [#allocation7], 4
      %s41 = int_to_ptr.vmem [resolvable:$true] %s40
      %46 = dma.hbm_to_vmem [thread:$0]  %s2, 512, %s41, [#allocation6], 128, 128, 8
    $region13: #{tpu_custom_call.1} parent=1 // pred_fallthru
      _
    // Predicated region
    $region14: #{tpu_custom_call.1} parent=1 // pred_check
      _
    $region15: #{tpu_custom_call.1} parent=1 // pred_check_branch
      %48 = sbr.rel (0) target = $region17
    $region16: #{tpu_custom_call.1} parent=1 // pred_region
      %49 = dma.done [#allocation3], 512
    $region17: #{tpu_custom_call.1} parent=1 // pred_fallthru
      _
    // Predicated region
    $region18: #{tpu_custom_call.1} parent=1 // pred_check
      _
    $region19: #{tpu_custom_call.1} parent=1 // pred_check_branch
      %51 = sbr.rel (0) target = $region21
    $region20: #{tpu_custom_call.1} parent=1 // pred_region
      %52 = dma.done [#allocation6], 512
    $region21: #{tpu_custom_call.1} parent=1 // pred_fallthru
      _
    // Predicated region
    $region22: #{tpu_custom_call.1} parent=1 // pred_check
      _
    $region23: #{tpu_custom_call.1} parent=1 // pred_check_branch
      %54 = sbr.rel (0) target = $region25
    $region24: #{tpu_custom_call.1} parent=1 // pred_region
      %55 = dma.done [#allocation6], 512
    $region25: #{tpu_custom_call.1} parent=1 // pred_fallthru
      _
    %v56 = vld [vmem:[#allocation7] sm:$0xff]
    %v57 = vld [vmem:[#allocation7 + $0x8] sm:$0xff]
    %v58 = vld [vmem:[#allocation7 + $0x10] sm:$0xff]
    %v59 = vld [vmem:[#allocation7 + $0x18] sm:$0xff]
    %v60 = vld [vmem:[#allocation2] sm:$0xff]
    %v61 = vld [vmem:[#allocation2 + $0x8] sm:$0xff]
    %v62 = vld [vmem:[#allocation2 + $0x10] sm:$0xff]
    %v63 = vld [vmem:[#allocation2 + $0x18] sm:$0xff]
    %v64 = vld [vmem:[#allocation5] sm:$0xff]
    %v65 = vld [vmem:[#allocation5 + $0x8] sm:$0xff]
    %v66 = vld [vmem:[#allocation5 + $0x10] sm:$0xff]
    %v67 = vld [vmem:[#allocation5 + $0x18] sm:$0xff]
    %v68 = vsub.f32 1.0, %v56
    %v69 = vsub.f32 1.0, %v57
    %v70 = vsub.f32 1.0, %v58
    %v71 = vsub.f32 1.0, %v59
    %v72 = vmul.f32 %v60, %v68
    %v73 = vmul.f32 %v61, %v69
    %v74 = vmul.f32 %v62, %v70
    %v75 = vmul.f32 %v63, %v71
    %v76 = vadd.f32 %v72, %v56
    %v77 = vadd.f32 %v73, %v57
    %v78 = vadd.f32 %v74, %v58
    %v79 = vadd.f32 %v75, %v59
    %v80 = vmul.f32 %v64, %v68
    %v81 = vmul.f32 %v65, %v69
    %v82 = vmul.f32 %v66, %v70
    %v83 = vmul.f32 %v67, %v71
    %84 = vst [vmem:[#allocation8] sm:$0xff] %v76
    %85 = vst [vmem:[#allocation8 + $0x8] sm:$0xff] %v77
    %86 = vst [vmem:[#allocation8 + $0x30] sm:$0xff] %v78
    %87 = vst [vmem:[#allocation8 + $0x38] sm:$0xff] %v79
    %s88 = scalar_lea.vmem [#allocation8], 16
    %89 = vst [vmem:[%s88] sm:$0xff] %v80
    %90 = vst [vmem:[%s88 + $0x8] sm:$0xff] %v81
    %91 = vst [vmem:[%s88 + $0x30] sm:$0xff] %v82
    %92 = vst [vmem:[%s88 + $0x38] sm:$0xff] %v83
    %s93 = scalar_lea.vmem [#allocation8], 32
    %94 = vst [vmem:[%s93] sm:$0xff] %v56
    %95 = vst [vmem:[%s93 + $0x8] sm:$0xff] %v57
    %96 = vst [vmem:[%s93 + $0x30] sm:$0xff] %v58
    %97 = vst [vmem:[%s93 + $0x38] sm:$0xff] %v59
    // Predicated region
    $region26: #{tpu_custom_call.1} parent=1 // pred_check
      _
    $region27: #{tpu_custom_call.1} parent=1 // pred_check_branch
      %99 = sbr.rel (0) target = $region29
    $region28: #{tpu_custom_call.1} parent=1 // pred_region
      %s101 = ssub.s32 1536, 1536
      %102 = vsyncadd [#allocation4], %s101
      %s103 = sshll.u32 [#allocation8], 4
      %s104 = int_to_ptr.vmem [resolvable:$true] %s103
      %109 = dma.vmem_to_hbm [thread:$0]  %s104, 1536, %s3, [#allocation4], 128, 128, 8
    $region29: #{tpu_custom_call.1} parent=1 // pred_fallthru
      _
    // Predicated region
    $region30: #{tpu_custom_call.1} parent=1 // pred_check
      _
    $region31: #{tpu_custom_call.1} parent=1 // pred_check_branch
      %111 = sbr.rel (0) target = $region33
    $region32: #{tpu_custom_call.1} parent=1 // pred_region
      %112 = dma.done [#allocation4], 1536
    $region33: #{tpu_custom_call.1} parent=1 // pred_fallthru
      _
    %113 = vsyncpa [#allocation3], 1
    %114 = vsyncpa [#allocation6], 1
    %115 = vsyncpa [#allocation4], 1

</llo_original>
